<compile_context>
chip_gen: v5e
topology: v5e:2x2
jax: 0.10.0
libtpu: 0.0.40
codegen_flags: <defaults>
</compile_context>

<pallas_src>
import jax
import jax.numpy as jnp
from jax.experimental import pallas as pl
from jax.experimental.pallas import tpu as pltpu


_LANE = 128
_MIB = 1024 * 1024


def _round_up(v, m):
    return ((v + m - 1) // m) * m


def _gsa_kernel(w_ref, b_ref, x_ref, o_ref):
    """GlobalSpatialAttention on one (TB, C, THW) tile.

    w_ref: VMEM (1, C, 1), x.dtype   (1x1-conv weight as a channel column)
    b_ref: SMEM (1,), f32            (conv bias)
    x_ref / o_ref: VMEM (TB, C, THW), native dtype
    """
    x = x_ref[...]
    # Full-tile multiply on the VPU; channel (sublane-axis) reduce on the XLU with f32
    # accumulation.  Only the (TB, 1, THW) logits / sigmoid live in f32.
    prod = x * w_ref[...]
    logits = jnp.sum(prod, axis=1, keepdims=True, dtype=jnp.float32)
    attn = jax.nn.sigmoid(logits + b_ref[0])
    o_ref[...] = x * attn.astype(x.dtype)


def _vmem_budget():
    """Generation-aware (tile-byte target, vmem_limit_bytes)."""
    try:
        cap = int(getattr(pltpu.get_tpu_info(), "vmem_capacity_bytes", 64 * _MIB))
    except Exception:  # pragma: no cover - conservative fallback
        cap = 64 * _MIB
    if cap >= 100 * _MIB:          # v5e / v6e: 128 MiB physical VMEM
        buffer_budget = 88 * _MIB
        vmem_limit = 100 * _MIB
    else:                          # v7x: 64 MiB physical VMEM
        buffer_budget = 32 * _MIB
        vmem_limit = 48 * _MIB
    # ~8 tile-sized buffers of headroom: 2x double-buffered input, 2x output, plus
    # in-kernel temporaries (product tile, f32 upcast for sub-f32 dtypes).
    tile_target = min(8 * _MIB, buffer_budget // 8)
    return tile_target, vmem_limit


def global_spatial_attention(x_nchw, weight, bias):
    """Pallas port of GlobalSpatialAttention.forward.

    x_nchw: (B, C, H, W); weight: (1, C, 1, 1); bias: (1,). Returns (B, C, H, W).
    """
    B, C, H, W = x_nchw.shape
    HW = H * W
    dtype = x_nchw.dtype
    itemsize = jnp.dtype(dtype).itemsize

    tile_target, vmem_limit = _vmem_budget()

    # Physical tile footprint: C pads to the sublane packing of the dtype
    # (8 rows f32, 16 bf16, 32 int8); HW pads to the 128-lane width.
    sub_pack = max(1, 32 // itemsize)
    c_phys = _round_up(C, sub_pack)
    hw128 = _round_up(HW, _LANE)
    per_image_bytes = c_phys * hw128 * itemsize

    if B > 1 and 2 * per_image_bytes <= tile_target:
        # Small images: pack several whole images per block so per-grid-step overhead is
        # amortized.  Keep >= 2 batch steps so both v7x TensorCores get work.
        thw = HW                     # full spatial dim (128-multiple not required)
        n_hw = 1
        tb = min(B, tile_target // per_image_bytes)
        tb = max(1, min(tb, B // 2))
        n_b = pl.cdiv(B, tb)
    else:
        # Large images: lane-dense spatial tiles sized from the byte target; the ragged
        # last tile is handled by Pallas boundary masking (no host pad / slice).
        tb = 1
        n_b = B
        budget_thw = (tile_target // (c_phys * itemsize)) // _LANE * _LANE
        thw = max(_LANE, min(hw128, budget_thw))
        n_hw = pl.cdiv(HW, thw)
        if n_b * n_hw < 2 and hw128 > _LANE:
            # Guarantee >= 2 grid steps so both v7x TensorCores have work.
            thw = _round_up(pl.cdiv(hw128, 2), _LANE)
            n_hw = pl.cdiv(HW, thw)

    grid = (n_b, n_hw)

    x = x_nchw.reshape(B, C, HW)                      # metadata-only reshape
    w_vmem = weight.reshape(1, C, 1).astype(dtype)    # channel column for the VPU multiply
    b_smem = bias.reshape(1).astype(jnp.float32)

    x_spec = pl.BlockSpec((tb, C, thw), lambda bi, si: (bi, 0, si))
    out_spec = pl.BlockSpec((tb, C, thw), lambda bi, si: (bi, 0, si))
    w_spec = pl.BlockSpec((1, C, 1), lambda bi, si: (0, 0, 0))
    b_spec = pl.BlockSpec(memory_space=pltpu.MemorySpace.SMEM)

    out = pl.pallas_call(
        _gsa_kernel,
        out_shape=jax.ShapeDtypeStruct((B, C, HW), dtype),
        grid_spec=pltpu.PrefetchScalarGridSpec(
            num_scalar_prefetch=0,
            grid=grid,
            in_specs=[w_spec, b_spec, x_spec],
            out_specs=out_spec,
        ),
        compiler_params=pltpu.CompilerParams(
            dimension_semantics=("parallel", "parallel"),
            vmem_limit_bytes=vmem_limit,
        ),
    )(w_vmem, b_smem, x)

    return out.reshape(B, C, H, W)


def _reference(x, weight, bias):
    # Pure-JAX reference of the PyTorch forward.
    w = weight.reshape(1, weight.shape[1], 1, 1)
    logits = jnp.sum(x * w, axis=1, keepdims=True) + bias.reshape(1, 1, 1, 1)
    return x * jax.nn.sigmoid(logits)


if __name__ == "__main__":
    key = jax.random.PRNGKey(0)
    kx, kw, kb = jax.random.split(key, 3)

    # Case 1: the canonical small shape (B=2, C=4, 16x16), f32.
    B, C, H, W = 2, 4, 16, 16
    x = jax.random.normal(kx, (B, C, H, W), dtype=jnp.float32)
    weight = jax.random.normal(kw, (1, C, 1, 1), dtype=jnp.float32) * 0.1
    bias = jax.random.normal(kb, (1,), dtype=jnp.float32) * 0.1
    out = jax.block_until_ready(global_spatial_attention(x, weight, bias))
    ref = _reference(x, weight, bias)
    assert out.shape == (B, C, H, W)
    assert jnp.allclose(out, ref, atol=1e-5, rtol=1e-5)

    # Case 2: ragged spatial size (10x10 -> 100 lanes, partial last block), C=32, B=1.
    kx2, kw2, kb2 = jax.random.split(jax.random.PRNGKey(1), 3)
    B2, C2, H2, W2 = 1, 32, 10, 10
    x2 = jax.random.normal(kx2, (B2, C2, H2, W2), dtype=jnp.float32)
    w2 = jax.random.normal(kw2, (1, C2, 1, 1), dtype=jnp.float32) * 0.1
    b2 = jax.random.normal(kb2, (1,), dtype=jnp.float32) * 0.1
    out2 = jax.block_until_ready(global_spatial_attention(x2, w2, b2))
    ref2 = _reference(x2, w2, b2)
    assert out2.shape == (B2, C2, H2, W2)
    assert jnp.allclose(out2, ref2, atol=1e-5, rtol=1e-5)

    # Case 3: many tiny images (B=8, C=4, 8x8) -> exercises the batch-blocked (TB>1) path.
    kx3, kw3, kb3 = jax.random.split(jax.random.PRNGKey(2), 3)
    B3, C3, H3, W3 = 8, 4, 8, 8
    x3 = jax.random.normal(kx3, (B3, C3, H3, W3), dtype=jnp.float32)
    w3 = jax.random.normal(kw3, (1, C3, 1, 1), dtype=jnp.float32) * 0.1
    b3 = jax.random.normal(kb3, (1,), dtype=jnp.float32) * 0.1
    out3 = jax.block_until_ready(global_spatial_attention(x3, w3, b3))
    ref3 = _reference(x3, w3, b3)
    assert out3.shape == (B3, C3, H3, W3)
    assert jnp.allclose(out3, ref3, atol=1e-5, rtol=1e-5)

    # Case 4: bf16 inputs with a ragged spatial size (mixed-precision tolerances).
    kx4, kw4, kb4 = jax.random.split(jax.random.PRNGKey(3), 3)
    B4, C4, H4, W4 = 2, 16, 12, 12
    x4 = jax.random.normal(kx4, (B4, C4, H4, W4), dtype=jnp.float32).astype(jnp.bfloat16)
    w4 = jax.random.normal(kw4, (1, C4, 1, 1), dtype=jnp.float32) * 0.1
    b4 = jax.random.normal(kb4, (1,), dtype=jnp.float32) * 0.1
    out4 = jax.block_until_ready(global_spatial_attention(x4, w4, b4))
    ref4 = _reference(x4.astype(jnp.float32), w4, b4)
    assert out4.shape == (B4, C4, H4, W4)
    assert jnp.allclose(out4.astype(jnp.float32), ref4, atol=2e-2, rtol=2e-2)

    print("KERNEL_OK")
</pallas_src>

<mosaic_0001>
module attributes {stable_mosaic.version = 11 : i64} {
  func.func @_gsa_kernel(%arg0: i32, %arg1: i32, %arg2: memref<1x4x1xf32, #tpu.memory_space<vmem>>, %arg3: memref<1xf32, #tpu.memory_space<smem>>, %arg4: memref<1x4x256xf32, #tpu.memory_space<vmem>>, %arg5: memref<1x4x256xf32, #tpu.memory_space<vmem>>) attributes {dimension_semantics = [#tpu.dimension_semantics<parallel>, #tpu.dimension_semantics<parallel>], iteration_bounds = array<i64: 2, 1>, scalar_prefetch = 0 : i64, scratch_operands = 0 : i64, tpu.core_type = #tpu.core_type<tc>, window_params = [{pipeline_mode = #tpu.pipeline_mode<synchronous>, transform_indices = @transform_0, window_bounds = array<i64: 1, 4, 1>}, {transform_indices = @transform_1, window_bounds = array<i64: 1>}, {transform_indices = @transform_2, window_bounds = array<i64: 1, 4, 256>}, {transform_indices = @transform_3, window_bounds = array<i64: 1, 4, 256>}]} {
    %c0 = arith.constant 0 : index
    %c0_0 = arith.constant 0 : index
    %c0_1 = arith.constant 0 : index
    %0 = vector.load %arg4[%c0, %c0_0, %c0_1] : memref<1x4x256xf32, #tpu.memory_space<vmem>>, vector<1x4x256xf32>
    %c0_2 = arith.constant 0 : index
    %c0_3 = arith.constant 0 : index
    %c0_4 = arith.constant 0 : index
    %1 = vector.load %arg2[%c0_2, %c0_3, %c0_4] : memref<1x4x1xf32, #tpu.memory_space<vmem>>, vector<1x4x1xf32>
    %2 = vector.broadcast %1 : vector<1x4x1xf32> to vector<1x4x256xf32>
    %3 = arith.mulf %0, %2 : vector<1x4x256xf32>
    %cst = arith.constant dense<0.000000e+00> : vector<1x256xf32>
    %4 = vector.multi_reduction <add>, %3, %cst [1] : vector<1x4x256xf32> to vector<1x256xf32>
    %5 = vector.shape_cast %4 : vector<1x256xf32> to vector<1x1x256xf32>
    %c0_5 = arith.constant 0 : index
    %6 = memref.load %arg3[%c0_5] : memref<1xf32, #tpu.memory_space<smem>>
    %7 = vector.broadcast %6 : f32 to vector<1x1x256xf32>
    %8 = arith.addf %5, %7 : vector<1x1x256xf32>
    %9 = arith.negf %8 : vector<1x1x256xf32>
    %10 = math.exp %9 : vector<1x1x256xf32>
    %cst_6 = arith.constant 1.000000e+00 : f32
    %11 = vector.broadcast %cst_6 : f32 to vector<1x1x256xf32>
    %12 = arith.addf %11, %10 : vector<1x1x256xf32>
    %13 = arith.divf %11, %12 : vector<1x1x256xf32>
    %14 = vector.broadcast %13 : vector<1x1x256xf32> to vector<1x4x256xf32>
    %15 = arith.mulf %0, %14 : vector<1x4x256xf32>
    %c0_7 = arith.constant 0 : index
    %c0_8 = arith.constant 0 : index
    %c0_9 = arith.constant 0 : index
    %16 = vector.load %arg5[%c0_7, %c0_8, %c0_9] : memref<1x4x256xf32, #tpu.memory_space<vmem>>, vector<1x4x256xf32>
    tpu.vector_store %arg5[%c0_7, %c0_8, %c0_9], %15 {strides = array<i32>} : memref<1x4x256xf32, #tpu.memory_space<vmem>>, vector<1x4x256xf32>,
    return
  }
  func.func @transform_0(%arg0: i32, %arg1: i32) -> (i32, i32, i32) {
    %c0_i32 = arith.constant 0 : i32
    %c0_i32_0 = arith.constant 0 : i32
    %c0_i32_1 = arith.constant 0 : i32
    %c0_i32_2 = arith.constant 0 : i32
    return %c0_i32, %c0_i32_0, %c0_i32_1 : i32, i32, i32
  }
  func.func @transform_1(%arg0: i32, %arg1: i32) -> i32 {
    %c0_i32 = arith.constant 0 : i32
    %c0_i32_0 = arith.constant 0 : i32
    return %c0_i32 : i32
  }
  func.func @transform_2(%arg0: i32, %arg1: i32) -> (i32, i32, i32) {
    %c0_i32 = arith.constant 0 : i32
    %c0_i32_0 = arith.constant 0 : i32
    return %arg0, %c0_i32, %arg1 : i32, i32, i32
  }
  func.func @transform_3(%arg0: i32, %arg1: i32) -> (i32, i32, i32) {
    %c0_i32 = arith.constant 0 : i32
    %c0_i32_0 = arith.constant 0 : i32
    return %arg0, %c0_i32, %arg1 : i32, i32, i32
  }
}

</mosaic_0001>

<llo_original>
// kernel: tpu_custom_call.1
$region0: #{tpu_custom_call.1}
  #allocation0 [shape = 'u32[]', space=smem, size = 0x4, offset = 0x4, fixed_abs, tag = 'smem constant byte address 0x4 - core index']
  #allocation1 [shape = 'u32[72,128]{1,0:T(1,128)}', space=vmem, size = 0x9000, scoped, tag = 'internal scratch']
  #allocation2 [shape = 'f32[1]{0:T(128)S(6)}', space=smem, size = 0x200, scoped, tag = 'scoped memory for tpu_custom_call.1']
  %s0 = inlined_call_operand.vmem [shape: f32[1,4,1], index: 0, kind: input, shape index: {}]
  %s1 = inlined_call_operand.<no memory space> [shape: f32[1], index: 1, kind: input, shape index: {}]
  %s2 = inlined_call_operand.hbm [shape: f32[2,4,256], index: 2, kind: input, shape index: {}]
  %s3 = inlined_call_operand.hbm [shape: f32[2,4,256], index: 3, kind: output, shape index: {}]
  %s4 = sld [smem:[#allocation0]]
  $region49: #{tpu_custom_call.1} parent=0
    _
  %s6 = ssub.s32 1, %s4
  %s7 = scalar_select 0, %s6, %s4
  %8 = sst [smem:[#allocation2]] %s1
  $region1: #{tpu_custom_call.1} parent=0
    #allocation3 [shape = 'u8[8192]{0}', space=vmem, size = 0x2000, scoped, tag = 'input window, operand 2']
    #allocation4 [shape = 's32[2]{0}', space=sflag, size = 0x8, scoped, tag = 'scoped memory for tpu_custom_call.1']
    #allocation5 [shape = 's32[2]{0}', space=sflag, size = 0x8, scoped, tag = 'scoped memory for tpu_custom_call.1']
    #allocation6 [shape = 'u8[8192]{0}', space=vmem, size = 0x2000, scoped, tag = 'output window, operand 0']
    %9 = vsyncpa [#allocation4], 0
    %s10 = scalar_lea.sflag [#allocation4], 1
    %11 = vsyncpa %s10, 0
    %12 = vsyncpa [#allocation5], 0
    %s13 = scalar_lea.sflag [#allocation5], 1
    %14 = vsyncpa %s13, 0
    loop: start=0, step=1, limit=4
    $region2: #{tpu_custom_call.1} parent=1 // loop_pre_header
      _
    $region3: #{tpu_custom_call.1} parent=1 // loop_header
      %s16 = sphi 0, %s20
      %p17 = scmp.ge.s32.totalorder %s16, 4
      %s23 = sphi 0, %s35
      %s24 = sphi 0, %s31
      %s25 = sphi 0, %s23
      %s26 = sphi 0, %s24
      %s27 = sphi 0, %s25
      %s28 = sphi 0, %s26
      %s36 = sphi 0, %s36
      %s38 = sphi 0, %s36
      %s39 = sphi 0, %s38
      %s53 = sphi 0, %s39
      %s57 = sphi 0, %s57
      %s59 = sphi 0, %s57
      %s60 = sphi 0, %s59
      %s74 = sphi 0, %s60
      %s82 = sphi 0, %s84
      %s85 = sphi 0, %s82
      %s86 = sphi 0, %s85
      %s102 = sphi 0, %s86
      %s110 = sphi 0, %s112
      %s113 = sphi 0, %s110
      %s114 = sphi 0, %s113
      %s130 = sphi 0, %s114
    $region4: #{tpu_custom_call.1} parent=1 // loop_header_branch
      %19 = sbr.rel (%p17) target = $region8
    $region5: #{tpu_custom_call.1} parent=1 // loop_body
      %s21 = ssub.s32 %s16, 1
      %s22 = ssub.s32 %s16, 2
      %s29 = sadd.s32 1, %s24
      %p30 = scmp.ge.s32.totalorder %s29, 1
      %s31 = scalar_select %p30, 0, %s29
      %s32 = sadd.s32 1, %s23
      %s33 = scalar_select %p30, %s32, %s23
      %p34 = scmp.ge.s32.totalorder %s33, 2
      %s35 = scalar_select %p34, 0, %s33
      %s37 = sadd.s32 %s36, 1
      %p40 = scmp.eq.s32.totalorder %s16, 1
      %p41 = scmp.ne.s32.totalorder %s36, %s38
      %p42 = scmp.eq.s32.totalorder %s16, 0
      %p43 = por %p41, %p42
      %p44 = scmp.ne.s32.totalorder %s36, %s38
      %p45 = scmp.eq.s32.totalorder %s21, 1
      %p46 = por %p44, %p45
      %p47 = scmp.ne.s32.totalorder %s38, %s39
      %p48 = scmp.eq.s32.totalorder %s21, 0
      %p49 = por %p47, %p48
      %p50 = scmp.ne.s32.totalorder %s38, %s39
      %p51 = scmp.eq.s32.totalorder %s22, 1
      %p52 = por %p50, %p51
      %p54 = scmp.ne.s32.totalorder %s39, %s53
      %p55 = scmp.eq.s32.totalorder %s22, 0
      %p56 = por %p54, %p55
      %s58 = sadd.s32 %s57, 1
      %p61 = scmp.eq.s32.totalorder %s16, 1
      %p62 = scmp.ne.s32.totalorder %s57, %s59
      %p63 = scmp.eq.s32.totalorder %s16, 0
      %p64 = por %p62, %p63
      %p65 = scmp.ne.s32.totalorder %s57, %s59
      %p66 = scmp.eq.s32.totalorder %s21, 1
      %p67 = por %p65, %p66
      %p68 = scmp.ne.s32.totalorder %s59, %s60
      %p69 = scmp.eq.s32.totalorder %s21, 0
      %p70 = por %p68, %p69
      %p71 = scmp.ne.s32.totalorder %s59, %s60
      %p72 = scmp.eq.s32.totalorder %s22, 1
      %p73 = por %p71, %p72
      %p75 = scmp.ne.s32.totalorder %s60, %s74
      %p76 = scmp.eq.s32.totalorder %s22, 0
      %p77 = por %p75, %p76
      %s78 = ssub.s32 %s23, %s35
      %s79 = ssub.s32 %s24, %s31
      %s80 = sor.u32 %s78, %s79
      %p81 = scmp.eq.s32.totalorder %s80, 0
      %s83 = sadd.s32 %s82, 1
      %s84 = scalar_select %p81, %s82, %s83
      %p87 = pneg %p81
      %p88 = scmp.eq.s32.totalorder %s16, 1
      %p89 = por %p87, %p88
      %p90 = scmp.ne.s32.totalorder %s82, %s85
      %p91 = scmp.eq.s32.totalorder %s16, 0
      %p92 = por %p90, %p91
      %p93 = scmp.ne.s32.totalorder %s82, %s85
      %p94 = scmp.eq.s32.totalorder %s21, 1
      %p95 = por %p93, %p94
      %p96 = scmp.ne.s32.totalorder %s85, %s86
      %p97 = scmp.eq.s32.totalorder %s21, 0
      %p98 = por %p96, %p97
      %p99 = scmp.ne.s32.totalorder %s85, %s86
      %p100 = scmp.eq.s32.totalorder %s22, 1
      %p101 = por %p99, %p100
      %p103 = scmp.ne.s32.totalorder %s86, %s102
      %p104 = scmp.eq.s32.totalorder %s22, 0
      %p105 = por %p103, %p104
      %s106 = ssub.s32 %s23, %s35
      %s107 = ssub.s32 %s24, %s31
      %s108 = sor.u32 %s106, %s107
      %p109 = scmp.eq.s32.totalorder %s108, 0
      %s111 = sadd.s32 %s110, 1
      %s112 = scalar_select %p109, %s110, %s111
      %p115 = pneg %p109
      %p116 = scmp.eq.s32.totalorder %s16, 1
      %p117 = por %p115, %p116
      %p118 = scmp.ne.s32.totalorder %s110, %s113
      %p119 = scmp.eq.s32.totalorder %s16, 0
      %p120 = por %p118, %p119
      %p121 = scmp.ne.s32.totalorder %s110, %s113
      %p122 = scmp.eq.s32.totalorder %s21, 1
      %p123 = por %p121, %p122
      %p124 = scmp.ne.s32.totalorder %s113, %s114
      %p125 = scmp.eq.s32.totalorder %s21, 0
      %p126 = por %p124, %p125
      %p127 = scmp.ne.s32.totalorder %s113, %s114
      %p128 = scmp.eq.s32.totalorder %s22, 1
      %p129 = por %p127, %p128
      %p131 = scmp.ne.s32.totalorder %s114, %s130
      %p132 = scmp.eq.s32.totalorder %s22, 0
      %p133 = por %p131, %p132
      %p134 = scmp.le.s32.totalorder 1, %s16
      %p135 = scmp.lt.s32.totalorder %s16, 3
      %p136 = pnand %p134, %p135
      %p137 = pneg %p136
      // Predicated region
      $region9: #{tpu_custom_call.1} parent=5 // pred_check
        _
      $region10: #{tpu_custom_call.1} parent=5 // pred_check_branch
        %139 = sbr.rel (%p136) target = $region12
      $region11: #{tpu_custom_call.1} parent=5 // pred_region
        %s140 = ssub.s32 %s16, 1
        // Predicated region
        $region13: #{tpu_custom_call.1} parent=11 // pred_check
          %p141 = pneg %p49
        $region14: #{tpu_custom_call.1} parent=11 // pred_check_branch
          %143 = sbr.rel (%p141) target = $region16
        $region15: #{tpu_custom_call.1} parent=11 // pred_region
          _
        $region16: #{tpu_custom_call.1} parent=11 // pred_fallthru
          _
        // Predicated region
        $region17: #{tpu_custom_call.1} parent=11 // pred_check
          %p144 = pneg %p70
        $region18: #{tpu_custom_call.1} parent=11 // pred_check_branch
          %146 = sbr.rel (%p144) target = $region20
        $region19: #{tpu_custom_call.1} parent=11 // pred_region
          _
        $region20: #{tpu_custom_call.1} parent=11 // pred_fallthru
          _
      $region12: #{tpu_custom_call.1} parent=5 // pred_fallthru
        _
      %p147 = scmp.lt.s32.totalorder %s16, 2
      // Predicated region
      $region21: #{tpu_custom_call.1} parent=5 // pred_check
        %p148 = pneg %p147
      $region22: #{tpu_custom_call.1} parent=5 // pred_check_branch
        %150 = sbr.rel (%p148) target = $region24
      $region23: #{tpu_custom_call.1} parent=5 // pred_region
        // Predicated region
        $region25: #{tpu_custom_call.1} parent=23 // pred_check
          %p151 = pneg %p92
        $region26: #{tpu_custom_call.1} parent=23 // pred_check_branch
          %153 = sbr.rel (%p151) target = $region28
        $region27: #{tpu_custom_call.1} parent=23 // pred_region
          %s154 = sand.u32 %s82, 1
          %s155 = scalar_lea.sflag [#allocation4], %s154
          %s156 = sand.u32 %s82, 1
          %s157 = smul.addr %s156, 8
          %s158 = scalar_lea.vmem [#allocation3], %s157
          %s159 = smul.u32 2, %s24
          %161 = vsyncadd %s155, 0
          %s162 = smul.addr %s23, 2
          %s163 = sadd.s32 %s159, %s162
          %s164 = smul.addr %s163, 4
          %s165 = scalar_lea.hbm %s2, %s164
          %s167 = sshll.u32 %s165, 4
          %s168 = int_to_ptr.hbm [resolvable:$true] %s167
          %s169 = sshll.u32 %s158, 4
          %s170 = int_to_ptr.vmem [resolvable:$true] %s169
          %172 = dma.hbm_to_vmem [thread:$0]  %s168, 128, %s170, %s155
        $region28: #{tpu_custom_call.1} parent=23 // pred_fallthru
          _
      $region24: #{tpu_custom_call.1} parent=5 // pred_fallthru
        _
      %p173 = scmp.le.s32.totalorder 1, %s16
      %p174 = scmp.lt.s32.totalorder %s16, 3
      %p175 = pnand %p173, %p174
      %p176 = pneg %p175
      // Predicated region
      $region29: #{tpu_custom_call.1} parent=5 // pred_check
        _
      $region30: #{tpu_custom_call.1} parent=5 // pred_check_branch
        %178 = sbr.rel (%p175) target = $region32
      $region31: #{tpu_custom_call.1} parent=5 // pred_region
        %s179 = ssub.s32 %s16, 1
        %s180 = sand.u32 %s85, 1
        %s181 = scalar_lea.sflag [#allocation4], %s180
        %s182 = sand.u32 %s85, 1
        %s183 = smul.addr %s182, 8
        %s184 = scalar_lea.vmem [#allocation3], %s183
        // Predicated region
        $region33: #{tpu_custom_call.1} parent=31 // pred_check
          %p185 = pneg %p98
        $region34: #{tpu_custom_call.1} parent=31 // pred_check_branch
          %187 = sbr.rel (%p185) target = $region36
        $region35: #{tpu_custom_call.1} parent=31 // pred_region
          %189 = dma.done %s181, 128
        $region36: #{tpu_custom_call.1} parent=31 // pred_fallthru
          _
        %p190 = pneg %p49
        %p191 = pneg %p46
        %p192 = pneg %p70
        %p193 = pneg %p67
        %s194 = sand.u32 %s85, 1
        %s195 = scalar_lea.sflag [#allocation4], %s194
        %s196 = sand.u32 %s85, 1
        %s197 = smul.addr %s196, 8
        %s198 = scalar_lea.vmem [#allocation3], %s197
        %p199 = pneg %p98
        %p200 = pneg %p95
        %p201 = pneg %p126
        %p202 = pneg %p123
        %s203 = sand.u32 %s113, 1
        %s204 = scalar_lea.sflag [#allocation5], %s203
        %s205 = sand.u32 %s113, 1
        %s206 = smul.addr %s205, 8
        %s207 = scalar_lea.vmem [#allocation6], %s206
        %s208 = smul.u32 2, %s26
        %s209 = smul.u32 2, %s26
        %v210 = vld [vmem:[%s184] sm:$0xff]
        %v211 = vld [vmem:[%s0] sm:$0xf]
        %213 = vset.pattern.permute.xlu0 0
        %214 = vperm.xlu0 %213, %v211
        %v215 = vpop.permute.xlu0 %214
        %v217 = vunpack.c.l.s4 839922192
        %v218 = vunpack.c.0.s8 %v217
        %v219 = vperm.slane %v215, %v218
        %v221 = vmul.f32 %v210, %v219
        %223 = vst [vmem:[#allocation1] ss:$2 sm:$0xff] %v221
        %v224 = vld.sshfl [vmem:[#allocation1] sm:$0xff pattern:$0x75316420]
        %v225 = vld.sshfl [vmem:[#allocation1 + $0x8] sm:$0xff pattern:$0x75316420]
        %vm228 = vcmask 1043456
        %v229 = vsel %vm228, %v224, 0.0
        %v230 = vrot.slane %v229, 4
        %v231 = vadd.f32 %v229, %v230
        %v232 = vrot.slane %v231, 2
        %v233 = vadd.f32 %v231, %v232
        %v234 = vrot.slane %v233, 1
        %v235 = vadd.f32 %v233, %v234
        %v236 = vsel %vm228, %v225, 0.0
        %v237 = vrot.slane %v236, 4
        %v238 = vadd.f32 %v236, %v237
        %v239 = vrot.slane %v238, 2
        %v240 = vadd.f32 %v238, %v239
        %v241 = vrot.slane %v240, 1
        %v242 = vadd.f32 %v240, %v241
        %s243 = sld [smem:[#allocation2]]
        %v244 = vstv %s243
        %v245 = vadd.f32 %v235, %v244
        %v246 = vadd.f32 %v242, %v244
        %v247 = vxor.u32 %v245, 2147483648
        %v248 = vxor.u32 %v246, 2147483648
        %v249 = vmul.f32 %v247, 1.442695
        %v250 = vpow.pop %v249
        %v251 = vmul.f32 %v248, 1.442695
        %v252 = vpow.pop %v251
        %v253 = vadd.f32 %v250, 1.0
        %v254 = vadd.f32 %v252, 1.0
        %v255 = vrcp.pop %v253
        %v256 = vmul.f32 %v253, %v255
        %v257 = vsub.f32 1.0, %v256
        %v258 = vmul.f32 %v255, %v257
        %v259 = vadd.f32 %v255, %v258
        %vm260 = vweird.f32 %v253
        %vm261 = vweird.f32 %v255
        %vm262 = vmor %vm260, %vm261
        %v263 = vsel %vm262, %v255, %v259
        %v264 = vand.u32 2147483647, %v253
        %vm265 = vcmp.eq.f32.partialorder %v264, 8.507059e+37
        %v266 = vand.u32 %v253, 2147483648
        %v267 = vor.u32 1.1754944e-38, %v266
        %v268 = vsel %vm265, %v267, %v263
        %v269 = vmul.f32 1.0, %v268
        %v270 = vrcp.pop %v254
        %v271 = vmul.f32 %v254, %v270
        %v272 = vsub.f32 1.0, %v271
        %v273 = vmul.f32 %v270, %v272
        %v274 = vadd.f32 %v270, %v273
        %vm275 = vweird.f32 %v254
        %vm276 = vweird.f32 %v270
        %vm277 = vmor %vm275, %vm276
        %v278 = vsel %vm277, %v270, %v274
        %v279 = vand.u32 2147483647, %v254
        %vm280 = vcmp.eq.f32.partialorder %v279, 8.507059e+37
        %v281 = vand.u32 %v254, 2147483648
        %v282 = vor.u32 1.1754944e-38, %v281
        %v283 = vsel %vm280, %v282, %v278
        %v284 = vmul.f32 1.0, %v283
        %v287 = vrot.slane %v284, 4
        %v288 = vsel %vm228, %v269, %v287
        %v290 = vmul.f32 %v210, %v288
        %291 = vst [vmem:[%s207] sm:$0xff] %v290
        %s292 = sand.u32 %s113, 1
        %s293 = scalar_lea.sflag [#allocation5], %s292
        %s294 = sand.u32 %s113, 1
        %s295 = smul.addr %s294, 8
        %s296 = scalar_lea.vmem [#allocation6], %s295
        // Predicated region
        $region37: #{tpu_custom_call.1} parent=31 // pred_check
          %p297 = pneg %p123
        $region38: #{tpu_custom_call.1} parent=31 // pred_check_branch
          %299 = sbr.rel (%p297) target = $region40
        $region39: #{tpu_custom_call.1} parent=31 // pred_region
          %s300 = smul.u32 2, %s26
          %302 = vsyncadd %s293, 0
          %s303 = smul.addr %s25, 2
          %s304 = sadd.s32 %s300, %s303
          %s305 = smul.addr %s304, 4
          %s306 = scalar_lea.hbm %s3, %s305
          %s308 = sshll.u32 %s296, 4
          %s309 = int_to_ptr.vmem [resolvable:$true] %s308
          %s310 = sshll.u32 %s306, 4
          %s311 = int_to_ptr.hbm [resolvable:$true] %s310
          %313 = dma.vmem_to_hbm [thread:$0]  %s309, 128, %s311, %s293
        $region40: #{tpu_custom_call.1} parent=31 // pred_fallthru
          _
      $region32: #{tpu_custom_call.1} parent=5 // pred_fallthru
        _
      %p314 = scmp.le.s32.totalorder 2, %s16
      // Predicated region
      $region41: #{tpu_custom_call.1} parent=5 // pred_check
        %p315 = pneg %p314
      $region42: #{tpu_custom_call.1} parent=5 // pred_check_branch
        %317 = sbr.rel (%p315) target = $region44
      $region43: #{tpu_custom_call.1} parent=5 // pred_region
        %s318 = ssub.s32 %s16, 2
        // Predicated region
        $region45: #{tpu_custom_call.1} parent=43 // pred_check
          %p319 = pneg %p129
        $region46: #{tpu_custom_call.1} parent=43 // pred_check_branch
          %321 = sbr.rel (%p319) target = $region48
        $region47: #{tpu_custom_call.1} parent=43 // pred_region
          %s322 = sand.u32 %s114, 1
          %s323 = scalar_lea.sflag [#allocation5], %s322
          %s324 = sand.u32 %s114, 1
          %s325 = smul.addr %s324, 8
          %s326 = scalar_lea.vmem [#allocation6], %s325
          %328 = dma.done %s323, 128
        $region48: #{tpu_custom_call.1} parent=43 // pred_fallthru
          _
      $region44: #{tpu_custom_call.1} parent=5 // pred_fallthru
        _
    $region6: #{tpu_custom_call.1} parent=1 // loop_footer
      %s20 = sadd.s32 1, %s16
    $region7: #{tpu_custom_call.1} parent=1 // loop_footer_branch
      %15 = sbr.rel target = $region3
    $region8: #{tpu_custom_call.1} parent=1 // loop_exit
      _
    %329 = vsyncpa [#allocation4], 1
    %s330 = scalar_lea.sflag [#allocation4], 1
    %331 = vsyncpa %s330, 1
    %332 = vsyncpa [#allocation5], 1
    %s333 = scalar_lea.sflag [#allocation5], 1
    %334 = vsyncpa %s333, 1

</llo_original>
